<compile_context>
chip_gen: v7x
topology: tpu7x:2x2x1
jax: 0.10.0
libtpu: 0.0.40
codegen_flags: <defaults>
</compile_context>

<pallas_src>
import jax
import jax.numpy as jnp
from jax.experimental import pallas as pl
from jax.experimental.pallas import tpu as pltpu

NEG_SLOPE = 0.01  # PyTorch nn.LeakyReLU default


def _leaky_relu(h):
    return jnp.where(h > 0, h, NEG_SLOPE * h)


def _mxu_dot(a, b):
    # Operands are already bf16 (at rest / pre-cast); f32 accumulation.
    return jnp.dot(a, b, preferred_element_type=jnp.float32)


def mlp_kernel(x_ref, w1_ref, b1_ref, w2_ref, b2_ref, w3_ref, b3_ref,
               w4_ref, b4_ref, o_ref):
    x = x_ref[...]                                                # (F, TB) bf16
    h = _leaky_relu(_mxu_dot(w1_ref[...], x) + b1_ref[...])      # (H, TB) f32
    h = _leaky_relu(_mxu_dot(w2_ref[...], h.astype(jnp.bfloat16)) + b2_ref[...])
    h = _leaky_relu(_mxu_dot(w3_ref[...], h.astype(jnp.bfloat16)) + b3_ref[...])
    # Final Linear(H,1): (1,H) bf16 . (H,TB) bf16 -> (1,TB) f32, scalar bias
    # from SMEM.  Lane-dense row with the batch on the lane axis.
    o = _mxu_dot(w4_ref[...], h.astype(jnp.bfloat16)) + b4_ref[0]
    o_ref[...] = o.astype(o_ref.dtype)                            # (1, TB)


def _round_up(n, m):
    return ((n + m - 1) // m) * m


def _choose_tiling(B, tb_max):
    """Pick (tb, num_tiles, padded_B): big lane-dense tiles, >=2 tiles when
    B allows it (v7x megacore), minimal padding."""
    tb_max = max(128, (tb_max // 128) * 128)
    half = _round_up(pl.cdiv(B, 2), 128)          # cap so num_tiles >= 2
    tb_cap = min(tb_max, max(128, half))
    num_tiles = pl.cdiv(B, tb_cap)
    tb = _round_up(pl.cdiv(B, num_tiles), 128)    # shrink back -> min padding
    return tb, num_tiles, num_tiles * tb


def mlp_forward(x, params, *, tb_max=4096):
    """x: (B, 30) float32. params: [(W, b), ...] with W:(in,out), b:(1,out)."""
    B, F = x.shape
    (w1, b1), (w2, b2), (w3, b3), (w4, b4) = params
    H = w1.shape[1]
    assert F == w1.shape[0] and w4.shape == (H, 1)

    tb, num_tiles, b_pad = _choose_tiling(B, tb_max)

    # Feature-major, bf16-at-rest activations; transposed bf16 weights.
    xt = x.T.astype(jnp.bfloat16)                 # (F, B)
    if b_pad != B:
        xt = jnp.pad(xt, ((0, 0), (0, b_pad - B)))
    w1t = w1.T.astype(jnp.bfloat16)               # (H, F)
    w2t = w2.T.astype(jnp.bfloat16)               # (H, H)
    w3t = w3.T.astype(jnp.bfloat16)               # (H, H)
    w4t = w4.T.astype(jnp.bfloat16)               # (1, H)
    b1c = b1.reshape(H, 1).astype(jnp.float32)    # bias columns, f32
    b2c = b2.reshape(H, 1).astype(jnp.float32)
    b3c = b3.reshape(H, 1).astype(jnp.float32)
    b4s = b4.reshape(1).astype(jnp.float32)       # SMEM scalar

    param_bytes = 2 * (w1t.size + w2t.size + w3t.size + w4t.size) \
        + 4 * (b1c.size + b2c.size + b3c.size + b4s.size)
    cost = pl.CostEstimate(
        flops=2 * b_pad * (F * H + 2 * H * H + H),
        transcendentals=0,
        bytes_accessed=2 * b_pad * F + 4 * b_pad + param_bytes,
    )

    const = lambda i: (0, 0)  # weights/biases stay VMEM-resident
    out_row = pl.pallas_call(
        mlp_kernel,
        out_shape=jax.ShapeDtypeStruct((1, b_pad), jnp.float32),
        grid=(num_tiles,),
        in_specs=[
            pl.BlockSpec((F, tb), lambda i: (0, i)),   # x: streamed per tile
            pl.BlockSpec((H, F), const), pl.BlockSpec((H, 1), const),
            pl.BlockSpec((H, H), const), pl.BlockSpec((H, 1), const),
            pl.BlockSpec((H, H), const), pl.BlockSpec((H, 1), const),
            pl.BlockSpec((1, H), const),
            pl.BlockSpec(memory_space=pltpu.MemorySpace.SMEM),   # b4 scalar
        ],
        out_specs=pl.BlockSpec((1, tb), lambda i: (0, i)),
        compiler_params=pltpu.CompilerParams(
            dimension_semantics=("parallel",),
            vmem_limit_bytes=32 * 1024 * 1024),
        cost_estimate=cost,
    )(xt, w1t, b1c, w2t, b2c, w3t, b3c, w4t, b4s)

    # (1, B_pad) lane-dense row -> (B, 1) column (cheap XLA reshape + slice).
    return out_row.reshape(b_pad, 1)[:B]


def init_params(key, hidden_size):
    """Deterministic init mirroring nn.Linear shapes (stored as (in, out))."""
    dims = [(30, hidden_size), (hidden_size, hidden_size),
            (hidden_size, hidden_size), (hidden_size, 1)]
    params = []
    for fan_in, fan_out in dims:
        key, kw, kb = jax.random.split(key, 3)
        bound = 1.0 / jnp.sqrt(fan_in)
        w = jax.random.uniform(kw, (fan_in, fan_out), jnp.float32, -bound, bound)
        b = jax.random.uniform(kb, (1, fan_out), jnp.float32, -bound, bound)
        params.append((w, b))
    return params


def mlp_reference(x, params, *, emulate_kernel_dtypes=False):
    h = x
    n = len(params)
    for idx, (w, b) in enumerate(params):
        last = idx == n - 1
        if emulate_kernel_dtypes:
            y = jnp.dot(h.astype(jnp.bfloat16), w.astype(jnp.bfloat16),
                        preferred_element_type=jnp.float32) + b
        else:
            y = jnp.dot(h, w, preferred_element_type=jnp.float32) + b
        h = y if last else _leaky_relu(y)
    return h


if __name__ == "__main__":
    key = jax.random.PRNGKey(0)
    k_x, k_p = jax.random.split(key)

    batch, hidden = 600, 32   # not a multiple of 128 -> exercises padding,
    x = jax.random.normal(k_x, (batch, 30), dtype=jnp.float32)  # and 2 tiles
    params = init_params(k_p, hidden)

    out = mlp_forward(x, params)
    jax.block_until_ready(out)
    assert out.shape == (batch, 1)

    # Tight check vs a reference mirroring the kernel's bf16-operand /
    # f32-accumulate matmuls, plus a loose sanity check vs pure f32.
    ref_bf16 = mlp_reference(x, params, emulate_kernel_dtypes=True)
    ref_f32 = mlp_reference(x, params, emulate_kernel_dtypes=False)
    assert jnp.allclose(out, ref_bf16, atol=2e-3, rtol=2e-3), \
        float(jnp.max(jnp.abs(out - ref_bf16)))
    assert jnp.allclose(out, ref_f32, atol=5e-2, rtol=5e-2), \
        float(jnp.max(jnp.abs(out - ref_f32)))

    # Single-tile / tiny-batch path.
    out_small = mlp_forward(x[:100], params)
    jax.block_until_ready(out_small)
    assert out_small.shape == (100, 1)
    assert jnp.allclose(out_small, ref_bf16[:100], atol=2e-3, rtol=2e-3)

    print("KERNEL_OK")
</pallas_src>

<mosaic_0001>
module attributes {stable_mosaic.version = 11 : i64} {
  func.func @mlp_kernel(%arg0: i32, %arg1: memref<30x384xbf16, #tpu.memory_space<vmem>>, %arg2: memref<32x30xbf16, #tpu.memory_space<vmem>>, %arg3: memref<32x1xf32, #tpu.memory_space<vmem>>, %arg4: memref<32x32xbf16, #tpu.memory_space<vmem>>, %arg5: memref<32x1xf32, #tpu.memory_space<vmem>>, %arg6: memref<32x32xbf16, #tpu.memory_space<vmem>>, %arg7: memref<32x1xf32, #tpu.memory_space<vmem>>, %arg8: memref<1x32xbf16, #tpu.memory_space<vmem>>, %arg9: memref<1xf32, #tpu.memory_space<smem>>, %arg10: memref<1x384xf32, #tpu.memory_space<vmem>>) attributes {dimension_semantics = [#tpu.dimension_semantics<parallel>], iteration_bounds = array<i64: 2>, scalar_prefetch = 0 : i64, scratch_operands = 0 : i64, tpu.core_type = #tpu.core_type<tc>, window_params = [{transform_indices = @transform_0, window_bounds = array<i64: 30, 384>}, {pipeline_mode = #tpu.pipeline_mode<synchronous>, transform_indices = @transform_1, window_bounds = array<i64: 32, 30>}, {pipeline_mode = #tpu.pipeline_mode<synchronous>, transform_indices = @transform_2, window_bounds = array<i64: 32, 1>}, {pipeline_mode = #tpu.pipeline_mode<synchronous>, transform_indices = @transform_3, window_bounds = array<i64: 32, 32>}, {pipeline_mode = #tpu.pipeline_mode<synchronous>, transform_indices = @transform_4, window_bounds = array<i64: 32, 1>}, {pipeline_mode = #tpu.pipeline_mode<synchronous>, transform_indices = @transform_5, window_bounds = array<i64: 32, 32>}, {pipeline_mode = #tpu.pipeline_mode<synchronous>, transform_indices = @transform_6, window_bounds = array<i64: 32, 1>}, {pipeline_mode = #tpu.pipeline_mode<synchronous>, transform_indices = @transform_7, window_bounds = array<i64: 1, 32>}, {transform_indices = @transform_8, window_bounds = array<i64: 1>}, {transform_indices = @transform_9, window_bounds = array<i64: 1, 384>}]} {
    %c0 = arith.constant 0 : index
    %c0_0 = arith.constant 0 : index
    %0 = vector.load %arg1[%c0, %c0_0] : memref<30x384xbf16, #tpu.memory_space<vmem>>, vector<30x384xbf16>
    %c0_1 = arith.constant 0 : index
    %c0_2 = arith.constant 0 : index
    %1 = vector.load %arg2[%c0_1, %c0_2] : memref<32x30xbf16, #tpu.memory_space<vmem>>, vector<32x30xbf16>
    %cst = arith.constant dense<0.000000e+00> : vector<32x384xf32>
    %2 = tpu.matmul %1, %0, %cst {dimension_numbers = #tpu.dot_dimension_numbers<[1], [0], [0], [1], [0, 0, 1, 1], [], []>} : vector<32x30xbf16>, vector<30x384xbf16>, vector<32x384xf32> -> vector<32x384xf32>
    %c0_3 = arith.constant 0 : index
    %c0_4 = arith.constant 0 : index
    %3 = vector.load %arg3[%c0_3, %c0_4] : memref<32x1xf32, #tpu.memory_space<vmem>>, vector<32x1xf32>
    %4 = vector.broadcast %3 : vector<32x1xf32> to vector<32x384xf32>
    %5 = arith.addf %2, %4 : vector<32x384xf32>
    %cst_5 = arith.constant 0.000000e+00 : f32
    %6 = vector.broadcast %cst_5 : f32 to vector<32x384xf32>
    %7 = arith.cmpf ogt, %5, %6 : vector<32x384xf32>
    %cst_6 = arith.constant 0.00999999977 : f32
    %8 = vector.broadcast %cst_6 : f32 to vector<32x384xf32>
    %9 = arith.mulf %8, %5 : vector<32x384xf32>
    %10 = arith.select %7, %5, %9 : vector<32x384xi1>, vector<32x384xf32>
    %c0_7 = arith.constant 0 : index
    %c0_8 = arith.constant 0 : index
    %11 = vector.load %arg4[%c0_7, %c0_8] : memref<32x32xbf16, #tpu.memory_space<vmem>>, vector<32x32xbf16>
    %12 = arith.truncf %10 : vector<32x384xf32> to vector<32x384xbf16>
    %cst_9 = arith.constant dense<0.000000e+00> : vector<32x384xf32>
    %13 = tpu.matmul %11, %12, %cst_9 {dimension_numbers = #tpu.dot_dimension_numbers<[1], [0], [0], [1], [0, 0, 1, 1], [], []>} : vector<32x32xbf16>, vector<32x384xbf16>, vector<32x384xf32> -> vector<32x384xf32>
    %c0_10 = arith.constant 0 : index
    %c0_11 = arith.constant 0 : index
    %14 = vector.load %arg5[%c0_10, %c0_11] : memref<32x1xf32, #tpu.memory_space<vmem>>, vector<32x1xf32>
    %15 = vector.broadcast %14 : vector<32x1xf32> to vector<32x384xf32>
    %16 = arith.addf %13, %15 : vector<32x384xf32>
    %cst_12 = arith.constant 0.000000e+00 : f32
    %17 = vector.broadcast %cst_12 : f32 to vector<32x384xf32>
    %18 = arith.cmpf ogt, %16, %17 : vector<32x384xf32>
    %cst_13 = arith.constant 0.00999999977 : f32
    %19 = vector.broadcast %cst_13 : f32 to vector<32x384xf32>
    %20 = arith.mulf %19, %16 : vector<32x384xf32>
    %21 = arith.select %18, %16, %20 : vector<32x384xi1>, vector<32x384xf32>
    %c0_14 = arith.constant 0 : index
    %c0_15 = arith.constant 0 : index
    %22 = vector.load %arg6[%c0_14, %c0_15] : memref<32x32xbf16, #tpu.memory_space<vmem>>, vector<32x32xbf16>
    %23 = arith.truncf %21 : vector<32x384xf32> to vector<32x384xbf16>
    %cst_16 = arith.constant dense<0.000000e+00> : vector<32x384xf32>
    %24 = tpu.matmul %22, %23, %cst_16 {dimension_numbers = #tpu.dot_dimension_numbers<[1], [0], [0], [1], [0, 0, 1, 1], [], []>} : vector<32x32xbf16>, vector<32x384xbf16>, vector<32x384xf32> -> vector<32x384xf32>
    %c0_17 = arith.constant 0 : index
    %c0_18 = arith.constant 0 : index
    %25 = vector.load %arg7[%c0_17, %c0_18] : memref<32x1xf32, #tpu.memory_space<vmem>>, vector<32x1xf32>
    %26 = vector.broadcast %25 : vector<32x1xf32> to vector<32x384xf32>
    %27 = arith.addf %24, %26 : vector<32x384xf32>
    %cst_19 = arith.constant 0.000000e+00 : f32
    %28 = vector.broadcast %cst_19 : f32 to vector<32x384xf32>
    %29 = arith.cmpf ogt, %27, %28 : vector<32x384xf32>
    %cst_20 = arith.constant 0.00999999977 : f32
    %30 = vector.broadcast %cst_20 : f32 to vector<32x384xf32>
    %31 = arith.mulf %30, %27 : vector<32x384xf32>
    %32 = arith.select %29, %27, %31 : vector<32x384xi1>, vector<32x384xf32>
    %c0_21 = arith.constant 0 : index
    %c0_22 = arith.constant 0 : index
    %33 = vector.load %arg8[%c0_21, %c0_22] : memref<1x32xbf16, #tpu.memory_space<vmem>>, vector<1x32xbf16>
    %34 = arith.truncf %32 : vector<32x384xf32> to vector<32x384xbf16>
    %cst_23 = arith.constant dense<0.000000e+00> : vector<1x384xf32>
    %35 = tpu.matmul %33, %34, %cst_23 {dimension_numbers = #tpu.dot_dimension_numbers<[1], [0], [0], [1], [0, 0, 1, 1], [], []>} : vector<1x32xbf16>, vector<32x384xbf16>, vector<1x384xf32> -> vector<1x384xf32>
    %c0_24 = arith.constant 0 : index
    %36 = memref.load %arg9[%c0_24] : memref<1xf32, #tpu.memory_space<smem>>
    %37 = vector.broadcast %36 : f32 to vector<1x384xf32>
    %38 = arith.addf %35, %37 : vector<1x384xf32>
    %c0_25 = arith.constant 0 : index
    %c0_26 = arith.constant 0 : index
    %39 = vector.load %arg10[%c0_25, %c0_26] : memref<1x384xf32, #tpu.memory_space<vmem>>, vector<1x384xf32>
    tpu.vector_store %arg10[%c0_25, %c0_26], %38 {strides = array<i32>} : memref<1x384xf32, #tpu.memory_space<vmem>>, vector<1x384xf32>,
    return
  }
  func.func @transform_0(%arg0: i32) -> (i32, i32) {
    %c0_i32 = arith.constant 0 : i32
    %c0_i32_0 = arith.constant 0 : i32
    return %c0_i32, %arg0 : i32, i32
  }
  func.func @transform_1(%arg0: i32) -> (i32, i32) {
    %c0_i32 = arith.constant 0 : i32
    %c0_i32_0 = arith.constant 0 : i32
    %c0_i32_1 = arith.constant 0 : i32
    return %c0_i32, %c0_i32_0 : i32, i32
  }
  func.func @transform_2(%arg0: i32) -> (i32, i32) {
    %c0_i32 = arith.constant 0 : i32
    %c0_i32_0 = arith.constant 0 : i32
    %c0_i32_1 = arith.constant 0 : i32
    return %c0_i32, %c0_i32_0 : i32, i32
  }
  func.func @transform_3(%arg0: i32) -> (i32, i32) {
    %c0_i32 = arith.constant 0 : i32
    %c0_i32_0 = arith.constant 0 : i32
    %c0_i32_1 = arith.constant 0 : i32
    return %c0_i32, %c0_i32_0 : i32, i32
  }
  func.func @transform_4(%arg0: i32) -> (i32, i32) {
    %c0_i32 = arith.constant 0 : i32
    %c0_i32_0 = arith.constant 0 : i32
    %c0_i32_1 = arith.constant 0 : i32
    return %c0_i32, %c0_i32_0 : i32, i32
  }
  func.func @transform_5(%arg0: i32) -> (i32, i32) {
    %c0_i32 = arith.constant 0 : i32
    %c0_i32_0 = arith.constant 0 : i32
    %c0_i32_1 = arith.constant 0 : i32
    return %c0_i32, %c0_i32_0 : i32, i32
  }
  func.func @transform_6(%arg0: i32) -> (i32, i32) {
    %c0_i32 = arith.constant 0 : i32
    %c0_i32_0 = arith.constant 0 : i32
    %c0_i32_1 = arith.constant 0 : i32
    return %c0_i32, %c0_i32_0 : i32, i32
  }
  func.func @transform_7(%arg0: i32) -> (i32, i32) {
    %c0_i32 = arith.constant 0 : i32
    %c0_i32_0 = arith.constant 0 : i32
    %c0_i32_1 = arith.constant 0 : i32
    return %c0_i32, %c0_i32_0 : i32, i32
  }
  func.func @transform_8(%arg0: i32) -> i32 {
    %c0_i32 = arith.constant 0 : i32
    %c0_i32_0 = arith.constant 0 : i32
    return %c0_i32 : i32
  }
  func.func @transform_9(%arg0: i32) -> (i32, i32) {
    %c0_i32 = arith.constant 0 : i32
    %c0_i32_0 = arith.constant 0 : i32
    return %c0_i32, %arg0 : i32, i32
  }
}

</mosaic_0001>

<llo_original>
// kernel: tpu_custom_call.1
$region0: #{tpu_custom_call.1}
  #allocation0 [shape = 'u32[]', space=smem, size = 0x4, offset = 0x4, fixed_abs, tag = 'smem constant byte address 0x4 - core index']
  #allocation1 [shape = 'u32[144,128]{1,0:T(1,128)}', space=vmem, size = 0x12000, scoped, tag = 'internal scratch']
  #allocation2 [shape = 'f32[1]{0:T(128)S(6)}', space=smem, size = 0x200, scoped, tag = 'scoped memory for tpu_custom_call.1']
  %s0 = inlined_call_operand.vmem [shape: bf16[30,768], index: 0, kind: input, shape index: {}]
  %s1 = inlined_call_operand.hbm [shape: bf16[32,30], index: 1, kind: input, shape index: {}]
  %s2 = inlined_call_operand.vmem [shape: f32[32,1], index: 2, kind: input, shape index: {}]
  %s3 = inlined_call_operand.vmem [shape: bf16[32,32], index: 3, kind: input, shape index: {}]
  %s4 = inlined_call_operand.vmem [shape: f32[32,1], index: 4, kind: input, shape index: {}]
  %s5 = inlined_call_operand.hbm [shape: bf16[32,32], index: 5, kind: input, shape index: {}]
  %s6 = inlined_call_operand.vmem [shape: f32[32,1], index: 6, kind: input, shape index: {}]
  %s7 = inlined_call_operand.vmem [shape: bf16[1,32], index: 7, kind: input, shape index: {}]
  %s8 = inlined_call_operand.<no memory space> [shape: f32[1], index: 8, kind: input, shape index: {}]
  %s9 = inlined_call_operand.hbm [shape: f32[1,768], index: 9, kind: output, shape index: {}]
  %s10 = sld [smem:[#allocation0]]
  $region103: #{tpu_custom_call.1} parent=0
    _
  %s12 = ssub.s32 1, %s10
  %s13 = scalar_select 0, %s12, %s10
  %14 = sst [smem:[#allocation2]] %s8
  $region1: #{tpu_custom_call.1} parent=0
    #allocation3 [shape = 'u8[49152]{0}', space=vmem, size = 0xc000, scoped, tag = 'input window, operand 0']
    #allocation4 [shape = 'u8[8192]{0}', space=vmem, size = 0x2000, scoped, tag = 'input window, operand 1, single buffered']
    #allocation5 [shape = 's32[2]{0}', space=sflag, size = 0x8, scoped, tag = 'scoped memory for tpu_custom_call.1']
    #allocation6 [shape = 's32[2]{0}', space=sflag, size = 0x8, scoped, tag = 'scoped memory for tpu_custom_call.1']
    #allocation7 [shape = 'u8[8192]{0}', space=vmem, size = 0x2000, scoped, tag = 'input window, operand 5, single buffered']
    #allocation8 [shape = 's32[1]{0}', space=sflag, size = 0x4, scoped, tag = 'scoped memory for tpu_custom_call.1']
    #allocation9 [shape = 'u8[3072]{0}', space=vmem, size = 0xc00, scoped, tag = 'output window, operand 0']
    %15 = vsyncpa [#allocation5], 0
    %16 = vsyncpa [#allocation8], 0
    %17 = vsyncpa [#allocation6], 0
    %s18 = scalar_lea.sflag [#allocation6], 1
    %19 = vsyncpa %s18, 0
    loop: start=0, step=1, limit=4
    $region2: #{tpu_custom_call.1} parent=1 // loop_pre_header
      _
    $region3: #{tpu_custom_call.1} parent=1 // loop_header
      %s21 = sphi 0, %s25
      %p22 = scmp.ge.s32.totalorder %s21, 4
      %s31 = sphi 0, %s33
      %s34 = sphi 0, %s31
      %s35 = sphi 0, %s34
      %s51 = sphi 0, %s35
      %s55 = sphi 0, %s55
      %s57 = sphi 0, %s55
      %s58 = sphi 0, %s57
      %s72 = sphi 0, %s58
      %s76 = sphi 0, %s76
      %s78 = sphi 0, %s76
      %s79 = sphi 0, %s78
      %s93 = sphi 0, %s79
      %s97 = sphi 0, %s97
      %s99 = sphi 0, %s97
      %s100 = sphi 0, %s99
      %s114 = sphi 0, %s100
      %s118 = sphi 0, %s118
      %s120 = sphi 0, %s118
      %s121 = sphi 0, %s120
      %s135 = sphi 0, %s121
      %s139 = sphi 0, %s139
      %s141 = sphi 0, %s139
      %s142 = sphi 0, %s141
      %s156 = sphi 0, %s142
      %s160 = sphi 0, %s160
      %s162 = sphi 0, %s160
      %s163 = sphi 0, %s162
      %s177 = sphi 0, %s163
      %s181 = sphi 0, %s181
      %s183 = sphi 0, %s181
      %s184 = sphi 0, %s183
      %s198 = sphi 0, %s184
      %s202 = sphi 0, %s202
      %s204 = sphi 0, %s202
      %s205 = sphi 0, %s204
      %s219 = sphi 0, %s205
      %s225 = sphi 0, %s227
      %s228 = sphi 0, %s225
      %s229 = sphi 0, %s228
      %s245 = sphi 0, %s229
    $region4: #{tpu_custom_call.1} parent=1 // loop_header_branch
      %24 = sbr.rel (%p22) target = $region8
    $region5: #{tpu_custom_call.1} parent=1 // loop_body
      %s26 = ssub.s32 %s21, 1
      %s27 = ssub.s32 %s21, 2
      %s28 = sadd.s32 %s21, 1
      %s29 = ssub.s32 %s21, %s28
      %p30 = scmp.eq.s32.totalorder %s29, 0
      %s32 = sadd.s32 %s31, 1
      %s33 = scalar_select %p30, %s31, %s32
      %p36 = pneg %p30
      %p37 = scmp.eq.s32.totalorder %s21, 1
      %p38 = por %p36, %p37
      %p39 = scmp.ne.s32.totalorder %s31, %s34
      %p40 = scmp.eq.s32.totalorder %s21, 0
      %p41 = por %p39, %p40
      %p42 = scmp.ne.s32.totalorder %s31, %s34
      %p43 = scmp.eq.s32.totalorder %s26, 1
      %p44 = por %p42, %p43
      %p45 = scmp.ne.s32.totalorder %s34, %s35
      %p46 = scmp.eq.s32.totalorder %s26, 0
      %p47 = por %p45, %p46
      %p48 = scmp.ne.s32.totalorder %s34, %s35
      %p49 = scmp.eq.s32.totalorder %s27, 1
      %p50 = por %p48, %p49
      %p52 = scmp.ne.s32.totalorder %s35, %s51
      %p53 = scmp.eq.s32.totalorder %s27, 0
      %p54 = por %p52, %p53
      %s56 = sadd.s32 %s55, 1
      %p59 = scmp.eq.s32.totalorder %s21, 1
      %p60 = scmp.ne.s32.totalorder %s55, %s57
      %p61 = scmp.eq.s32.totalorder %s21, 0
      %p62 = por %p60, %p61
      %p63 = scmp.ne.s32.totalorder %s55, %s57
      %p64 = scmp.eq.s32.totalorder %s26, 1
      %p65 = por %p63, %p64
      %p66 = scmp.ne.s32.totalorder %s57, %s58
      %p67 = scmp.eq.s32.totalorder %s26, 0
      %p68 = por %p66, %p67
      %p69 = scmp.ne.s32.totalorder %s57, %s58
      %p70 = scmp.eq.s32.totalorder %s27, 1
      %p71 = por %p69, %p70
      %p73 = scmp.ne.s32.totalorder %s58, %s72
      %p74 = scmp.eq.s32.totalorder %s27, 0
      %p75 = por %p73, %p74
      %s77 = sadd.s32 %s76, 1
      %p80 = scmp.eq.s32.totalorder %s21, 1
      %p81 = scmp.ne.s32.totalorder %s76, %s78
      %p82 = scmp.eq.s32.totalorder %s21, 0
      %p83 = por %p81, %p82
      %p84 = scmp.ne.s32.totalorder %s76, %s78
      %p85 = scmp.eq.s32.totalorder %s26, 1
      %p86 = por %p84, %p85
      %p87 = scmp.ne.s32.totalorder %s78, %s79
      %p88 = scmp.eq.s32.totalorder %s26, 0
      %p89 = por %p87, %p88
      %p90 = scmp.ne.s32.totalorder %s78, %s79
      %p91 = scmp.eq.s32.totalorder %s27, 1
      %p92 = por %p90, %p91
      %p94 = scmp.ne.s32.totalorder %s79, %s93
      %p95 = scmp.eq.s32.totalorder %s27, 0
      %p96 = por %p94, %p95
      %s98 = sadd.s32 %s97, 1
      %p101 = scmp.eq.s32.totalorder %s21, 1
      %p102 = scmp.ne.s32.totalorder %s97, %s99
      %p103 = scmp.eq.s32.totalorder %s21, 0
      %p104 = por %p102, %p103
      %p105 = scmp.ne.s32.totalorder %s97, %s99
      %p106 = scmp.eq.s32.totalorder %s26, 1
      %p107 = por %p105, %p106
      %p108 = scmp.ne.s32.totalorder %s99, %s100
      %p109 = scmp.eq.s32.totalorder %s26, 0
      %p110 = por %p108, %p109
      %p111 = scmp.ne.s32.totalorder %s99, %s100
      %p112 = scmp.eq.s32.totalorder %s27, 1
      %p113 = por %p111, %p112
      %p115 = scmp.ne.s32.totalorder %s100, %s114
      %p116 = scmp.eq.s32.totalorder %s27, 0
      %p117 = por %p115, %p116
      %s119 = sadd.s32 %s118, 1
      %p122 = scmp.eq.s32.totalorder %s21, 1
      %p123 = scmp.ne.s32.totalorder %s118, %s120
      %p124 = scmp.eq.s32.totalorder %s21, 0
      %p125 = por %p123, %p124
      %p126 = scmp.ne.s32.totalorder %s118, %s120
      %p127 = scmp.eq.s32.totalorder %s26, 1
      %p128 = por %p126, %p127
      %p129 = scmp.ne.s32.totalorder %s120, %s121
      %p130 = scmp.eq.s32.totalorder %s26, 0
      %p131 = por %p129, %p130
      %p132 = scmp.ne.s32.totalorder %s120, %s121
      %p133 = scmp.eq.s32.totalorder %s27, 1
      %p134 = por %p132, %p133
      %p136 = scmp.ne.s32.totalorder %s121, %s135
      %p137 = scmp.eq.s32.totalorder %s27, 0
      %p138 = por %p136, %p137
      %s140 = sadd.s32 %s139, 1
      %p143 = scmp.eq.s32.totalorder %s21, 1
      %p144 = scmp.ne.s32.totalorder %s139, %s141
      %p145 = scmp.eq.s32.totalorder %s21, 0
      %p146 = por %p144, %p145
      %p147 = scmp.ne.s32.totalorder %s139, %s141
      %p148 = scmp.eq.s32.totalorder %s26, 1
      %p149 = por %p147, %p148
      %p150 = scmp.ne.s32.totalorder %s141, %s142
      %p151 = scmp.eq.s32.totalorder %s26, 0
      %p152 = por %p150, %p151
      %p153 = scmp.ne.s32.totalorder %s141, %s142
      %p154 = scmp.eq.s32.totalorder %s27, 1
      %p155 = por %p153, %p154
      %p157 = scmp.ne.s32.totalorder %s142, %s156
      %p158 = scmp.eq.s32.totalorder %s27, 0
      %p159 = por %p157, %p158
      %s161 = sadd.s32 %s160, 1
      %p164 = scmp.eq.s32.totalorder %s21, 1
      %p165 = scmp.ne.s32.totalorder %s160, %s162
      %p166 = scmp.eq.s32.totalorder %s21, 0
      %p167 = por %p165, %p166
      %p168 = scmp.ne.s32.totalorder %s160, %s162
      %p169 = scmp.eq.s32.totalorder %s26, 1
      %p170 = por %p168, %p169
      %p171 = scmp.ne.s32.totalorder %s162, %s163
      %p172 = scmp.eq.s32.totalorder %s26, 0
      %p173 = por %p171, %p172
      %p174 = scmp.ne.s32.totalorder %s162, %s163
      %p175 = scmp.eq.s32.totalorder %s27, 1
      %p176 = por %p174, %p175
      %p178 = scmp.ne.s32.totalorder %s163, %s177
      %p179 = scmp.eq.s32.totalorder %s27, 0
      %p180 = por %p178, %p179
      %s182 = sadd.s32 %s181, 1
      %p185 = scmp.eq.s32.totalorder %s21, 1
      %p186 = scmp.ne.s32.totalorder %s181, %s183
      %p187 = scmp.eq.s32.totalorder %s21, 0
      %p188 = por %p186, %p187
      %p189 = scmp.ne.s32.totalorder %s181, %s183
      %p190 = scmp.eq.s32.totalorder %s26, 1
      %p191 = por %p189, %p190
      %p192 = scmp.ne.s32.totalorder %s183, %s184
      %p193 = scmp.eq.s32.totalorder %s26, 0
      %p194 = por %p192, %p193
      %p195 = scmp.ne.s32.totalorder %s183, %s184
      %p196 = scmp.eq.s32.totalorder %s27, 1
      %p197 = por %p195, %p196
      %p199 = scmp.ne.s32.totalorder %s184, %s198
      %p200 = scmp.eq.s32.totalorder %s27, 0
      %p201 = por %p199, %p200
      %s203 = sadd.s32 %s202, 1
      %p206 = scmp.eq.s32.totalorder %s21, 1
      %p207 = scmp.ne.s32.totalorder %s202, %s204
      %p208 = scmp.eq.s32.totalorder %s21, 0
      %p209 = por %p207, %p208
      %p210 = scmp.ne.s32.totalorder %s202, %s204
      %p211 = scmp.eq.s32.totalorder %s26, 1
      %p212 = por %p210, %p211
      %p213 = scmp.ne.s32.totalorder %s204, %s205
      %p214 = scmp.eq.s32.totalorder %s26, 0
      %p215 = por %p213, %p214
      %p216 = scmp.ne.s32.totalorder %s204, %s205
      %p217 = scmp.eq.s32.totalorder %s27, 1
      %p218 = por %p216, %p217
      %p220 = scmp.ne.s32.totalorder %s205, %s219
      %p221 = scmp.eq.s32.totalorder %s27, 0
      %p222 = por %p220, %p221
      %s223 = ssub.s32 %s21, %s28
      %p224 = scmp.eq.s32.totalorder %s223, 0
      %s226 = sadd.s32 %s225, 1
      %s227 = scalar_select %p224, %s225, %s226
      %p230 = pneg %p224
      %p231 = scmp.eq.s32.totalorder %s21, 1
      %p232 = por %p230, %p231
      %p233 = scmp.ne.s32.totalorder %s225, %s228
      %p234 = scmp.eq.s32.totalorder %s21, 0
      %p235 = por %p233, %p234
      %p236 = scmp.ne.s32.totalorder %s225, %s228
      %p237 = scmp.eq.s32.totalorder %s26, 1
      %p238 = por %p236, %p237
      %p239 = scmp.ne.s32.totalorder %s228, %s229
      %p240 = scmp.eq.s32.totalorder %s26, 0
      %p241 = por %p239, %p240
      %p242 = scmp.ne.s32.totalorder %s228, %s229
      %p243 = scmp.eq.s32.totalorder %s27, 1
      %p244 = por %p242, %p243
      %p246 = scmp.ne.s32.totalorder %s229, %s245
      %p247 = scmp.eq.s32.totalorder %s27, 0
      %p248 = por %p246, %p247
      %p249 = scmp.le.s32.totalorder 1, %s21
      %p250 = scmp.lt.s32.totalorder %s21, 3
      %p251 = pnand %p249, %p250
      %p252 = pneg %p251
      // Predicated region
      $region9: #{tpu_custom_call.1} parent=5 // pred_check
        _
      $region10: #{tpu_custom_call.1} parent=5 // pred_check_branch
        %254 = sbr.rel (%p251) target = $region12
      $region11: #{tpu_custom_call.1} parent=5 // pred_region
        %s255 = ssub.s32 %s21, 1
        // Predicated region
        $region13: #{tpu_custom_call.1} parent=11 // pred_check
          %p256 = pneg %p68
        $region14: #{tpu_custom_call.1} parent=11 // pred_check_branch
          %258 = sbr.rel (%p256) target = $region16
        $region15: #{tpu_custom_call.1} parent=11 // pred_region
          %s260 = ssub.s32 256, 256
          %261 = vsyncadd [#allocation5], %s260
          %s262 = sshll.u32 [#allocation4], 4
          %s263 = int_to_ptr.vmem [resolvable:$true] %s262
          %268 = dma.hbm_to_vmem [thread:$0]  %s1, 256, %s263, [#allocation5], 64, 64, 4
        $region16: #{tpu_custom_call.1} parent=11 // pred_fallthru
          _
        // Predicated region
        $region17: #{tpu_custom_call.1} parent=11 // pred_check
          %p269 = pneg %p89
        $region18: #{tpu_custom_call.1} parent=11 // pred_check_branch
          %271 = sbr.rel (%p269) target = $region20
        $region19: #{tpu_custom_call.1} parent=11 // pred_region
          _
        $region20: #{tpu_custom_call.1} parent=11 // pred_fallthru
          _
        // Predicated region
        $region21: #{tpu_custom_call.1} parent=11 // pred_check
          %p272 = pneg %p110
        $region22: #{tpu_custom_call.1} parent=11 // pred_check_branch
          %274 = sbr.rel (%p272) target = $region24
        $region23: #{tpu_custom_call.1} parent=11 // pred_region
          _
        $region24: #{tpu_custom_call.1} parent=11 // pred_fallthru
          _
        // Predicated region
        $region25: #{tpu_custom_call.1} parent=11 // pred_check
          %p275 = pneg %p131
        $region26: #{tpu_custom_call.1} parent=11 // pred_check_branch
          %277 = sbr.rel (%p275) target = $region28
        $region27: #{tpu_custom_call.1} parent=11 // pred_region
          _
        $region28: #{tpu_custom_call.1} parent=11 // pred_fallthru
          _
        // Predicated region
        $region29: #{tpu_custom_call.1} parent=11 // pred_check
          %p278 = pneg %p152
        $region30: #{tpu_custom_call.1} parent=11 // pred_check_branch
          %280 = sbr.rel (%p278) target = $region32
        $region31: #{tpu_custom_call.1} parent=11 // pred_region
          %s282 = ssub.s32 256, 256
          %283 = vsyncadd [#allocation8], %s282
          %s284 = sshll.u32 [#allocation7], 4
          %s285 = int_to_ptr.vmem [resolvable:$true] %s284
          %290 = dma.hbm_to_vmem [thread:$0]  %s5, 256, %s285, [#allocation8], 64, 64, 4
        $region32: #{tpu_custom_call.1} parent=11 // pred_fallthru
          _
        // Predicated region
        $region33: #{tpu_custom_call.1} parent=11 // pred_check
          %p291 = pneg %p173
        $region34: #{tpu_custom_call.1} parent=11 // pred_check_branch
          %293 = sbr.rel (%p291) target = $region36
        $region35: #{tpu_custom_call.1} parent=11 // pred_region
          _
        $region36: #{tpu_custom_call.1} parent=11 // pred_fallthru
          _
        // Predicated region
        $region37: #{tpu_custom_call.1} parent=11 // pred_check
          %p294 = pneg %p194
        $region38: #{tpu_custom_call.1} parent=11 // pred_check_branch
          %296 = sbr.rel (%p294) target = $region40
        $region39: #{tpu_custom_call.1} parent=11 // pred_region
          _
        $region40: #{tpu_custom_call.1} parent=11 // pred_fallthru
          _
        // Predicated region
        $region41: #{tpu_custom_call.1} parent=11 // pred_check
          %p297 = pneg %p215
        $region42: #{tpu_custom_call.1} parent=11 // pred_check_branch
          %299 = sbr.rel (%p297) target = $region44
        $region43: #{tpu_custom_call.1} parent=11 // pred_region
          _
        $region44: #{tpu_custom_call.1} parent=11 // pred_fallthru
          _
      $region12: #{tpu_custom_call.1} parent=5 // pred_fallthru
        _
      %p300 = scmp.lt.s32.totalorder %s21, 2
      // Predicated region
      $region45: #{tpu_custom_call.1} parent=5 // pred_check
        %p301 = pneg %p300
      $region46: #{tpu_custom_call.1} parent=5 // pred_check_branch
        %303 = sbr.rel (%p301) target = $region48
      $region47: #{tpu_custom_call.1} parent=5 // pred_region
        // Predicated region
        $region49: #{tpu_custom_call.1} parent=47 // pred_check
          %p304 = pneg %p41
        $region50: #{tpu_custom_call.1} parent=47 // pred_check_branch
          %306 = sbr.rel (%p304) target = $region52
        $region51: #{tpu_custom_call.1} parent=47 // pred_region
          %s307 = sand.u32 %s31, 1
          %s308 = sand.u32 %s31, 1
          %s309 = smul.addr %s308, 48
          %s310 = scalar_lea.vmem [#allocation3], %s309
          %s311 = smul.u32 3, %s21
          %s312 = smul.addr %s311, 4
          %s313 = scalar_lea.vmem %s0, %s312
          // Predicated region
          $region53: #{tpu_custom_call.1} parent=51 // pred_check
            _
          $region54: #{tpu_custom_call.1} parent=51 // pred_check_branch
            %315 = sbr.rel (0) target = $region56
          $region55: #{tpu_custom_call.1} parent=51 // pred_region
            // Predicated region
            $region57: #{tpu_custom_call.1} parent=55 // pred_check
              _
            $region58: #{tpu_custom_call.1} parent=55 // pred_check_branch
              %317 = sbr.rel (0) target = $region60
            $region59: #{tpu_custom_call.1} parent=55 // pred_region
              %s318 = scalar_lea.vmem %s313, 8
              %s319 = scalar_lea.vmem %s310, 8 [#allocation3]
              loop: start=0, step=1, limit=1
              $region61: #{tpu_custom_call.1} parent=59 // loop_pre_header
                _
              $region62: #{tpu_custom_call.1} parent=59 // loop_header
                %s321 = sphi 0, %s325
                %p322 = scmp.ge.s32.totalorder %s321, 1
                %s326 = sphi %s313, %s313
                %s327 = sphi %s310, %s310
              $region63: #{tpu_custom_call.1} parent=59 // loop_header_branch
                %324 = sbr.rel (%p322) target = $region67
              $region64: #{tpu_custom_call.1} parent=59 // loop_body
                %v328 = vld [vmem:[%s326] sm:$0xff]
                %329 = vst [vmem:[%s327] sm:$0xff] %v328
                %v330 = vld [vmem:[%s326 + $0x18] sm:$0xff]
                %331 = vst [vmem:[%s327 + $0xc] sm:$0xff] %v330
                %v332 = vld [vmem:[%s326 + $0x30] sm:$0xff]
                %333 = vst [vmem:[%s327 + $0x18] sm:$0xff] %v332
                %v334 = vld [vmem:[%s326 + $0x48] sm:$0xff]
                %335 = vst [vmem:[%s327 + $0x24] sm:$0xff] %v334
              $region65: #{tpu_custom_call.1} parent=59 // loop_footer
                %s325 = sadd.s32 1, %s321
              $region66: #{tpu_custom_call.1} parent=59 // loop_footer_branch
                %320 = sbr.rel target = $region62
              $region67: #{tpu_custom_call.1} parent=59 // loop_exit
                _
              loop: start=0, step=1, limit=1
              $region68: #{tpu_custom_call.1} parent=59 // loop_pre_header
                _
              $region69: #{tpu_custom_call.1} parent=59 // loop_header
                %s338 = sphi 0, %s342
                %p339 = scmp.ge.s32.totalorder %s338, 1
                %s343 = sphi %s318, %s318
                %s344 = sphi %s319, %s319
              $region70: #{tpu_custom_call.1} parent=59 // loop_header_branch
                %341 = sbr.rel (%p339) target = $region74
              $region71: #{tpu_custom_call.1} parent=59 // loop_body
                %v345 = vld [vmem:[%s343] sm:$0xf]
                %346 = vst [vmem:[%s344] sm:$0xf] %v345
                %v347 = vld [vmem:[%s343 + $0x18] sm:$0xf]
                %348 = vst [vmem:[%s344 + $0xc] sm:$0xf] %v347
                %v349 = vld [vmem:[%s343 + $0x30] sm:$0xf]
                %350 = vst [vmem:[%s344 + $0x18] sm:$0xf] %v349
                %v351 = vld [vmem:[%s343 + $0x48] sm:$0xf]
                %352 = vst [vmem:[%s344 + $0x24] sm:$0xf] %v351
              $region72: #{tpu_custom_call.1} parent=59 // loop_footer
                %s342 = sadd.s32 1, %s338
              $region73: #{tpu_custom_call.1} parent=59 // loop_footer_branch
                %337 = sbr.rel target = $region69
              $region74: #{tpu_custom_call.1} parent=59 // loop_exit
                _
            $region60: #{tpu_custom_call.1} parent=55 // pred_fallthru
              _
          $region56: #{tpu_custom_call.1} parent=51 // pred_fallthru
            _
          %353 = vnop
        $region52: #{tpu_custom_call.1} parent=47 // pred_fallthru
          _
      $region48: #{tpu_custom_call.1} parent=5 // pred_fallthru
        _
      %p354 = scmp.le.s32.totalorder 1, %s21
      %p355 = scmp.lt.s32.totalorder %s21, 3
      %p356 = pnand %p354, %p355
      %p357 = pneg %p356
      // Predicated region
      $region75: #{tpu_custom_call.1} parent=5 // pred_check
        _
      $region76: #{tpu_custom_call.1} parent=5 // pred_check_branch
        %359 = sbr.rel (%p356) target = $region78
      $region77: #{tpu_custom_call.1} parent=5 // pred_region
        %s360 = ssub.s32 %s21, 1
        %s361 = sand.u32 %s34, 1
        %s362 = sand.u32 %s34, 1
        %s363 = smul.addr %s362, 48
        %s364 = scalar_lea.vmem [#allocation3], %s363
        // Predicated region
        $region79: #{tpu_custom_call.1} parent=77 // pred_check
          %p365 = pneg %p47
        $region80: #{tpu_custom_call.1} parent=77 // pred_check_branch
          %367 = sbr.rel (%p365) target = $region82
        $region81: #{tpu_custom_call.1} parent=77 // pred_region
          _
        $region82: #{tpu_custom_call.1} parent=77 // pred_fallthru
          _
        // Predicated region
        $region83: #{tpu_custom_call.1} parent=77 // pred_check
          %p368 = pneg %p68
        $region84: #{tpu_custom_call.1} parent=77 // pred_check_branch
          %370 = sbr.rel (%p368) target = $region86
        $region85: #{tpu_custom_call.1} parent=77 // pred_region
          %371 = dma.done [#allocation5], 256
        $region86: #{tpu_custom_call.1} parent=77 // pred_fallthru
          _
        // Predicated region
        $region87: #{tpu_custom_call.1} parent=77 // pred_check
          %p372 = pneg %p152
        $region88: #{tpu_custom_call.1} parent=77 // pred_check_branch
          %374 = sbr.rel (%p372) target = $region90
        $region89: #{tpu_custom_call.1} parent=77 // pred_region
          %375 = dma.done [#allocation8], 256
        $region90: #{tpu_custom_call.1} parent=77 // pred_fallthru
          _
        %s376 = sand.u32 %s34, 1
        %s377 = sand.u32 %s34, 1
        %s378 = smul.addr %s377, 48
        %s379 = scalar_lea.vmem [#allocation3], %s378
        %p380 = pneg %p47
        %p381 = pneg %p44
        %p382 = pneg %p68
        %p383 = pneg %p65
        %p384 = pneg %p89
        %p385 = pneg %p86
        %p386 = pneg %p110
        %p387 = pneg %p107
        %p388 = pneg %p131
        %p389 = pneg %p128
        %p390 = pneg %p152
        %p391 = pneg %p149
        %p392 = pneg %p173
        %p393 = pneg %p170
        %p394 = pneg %p194
        %p395 = pneg %p191
        %p396 = pneg %p215
        %p397 = pneg %p212
        %p398 = pneg %p241
        %p399 = pneg %p238
        %s400 = sand.u32 %s228, 1
        %s401 = scalar_lea.sflag [#allocation6], %s400
        %s402 = sand.u32 %s228, 1
        %s403 = smul.addr %s402, 3
        %s404 = scalar_lea.vmem [#allocation9], %s403
        %s405 = smul.u32 3, %s26
        %s406 = smul.u32 3, %s26
        %v408 = vld [vmem:[%s364] sm:$0xff]
        %v409 = vld [vmem:[%s364 + $0x8] sm:$0xf]
        %v410 = vld [vmem:[%s364 + $0xc] sm:$0xff]
        %v411 = vld [vmem:[%s364 + $0x14] sm:$0xf]
        %v412 = vld [vmem:[%s364 + $0x18] sm:$0xff]
        %v413 = vld [vmem:[%s364 + $0x20] sm:$0xf]
        %v414 = vld [vmem:[%s364 + $0x24] sm:$0x77]
        %v415 = vld [vmem:[%s364 + $0x2c] sm:$0x7]
        %v416 = vld [vmem:[#allocation4] sm:$0xf]
        %v417 = vld [vmem:[#allocation4 + $0x4] sm:$0xf]
        %v418 = vld [vmem:[#allocation4 + $0x8] sm:$0xf]
        %v419 = vld [vmem:[#allocation4 + $0xc] sm:$0xf]
        %v420 = vld [vmem:[%s2] sm:$0xff]
        %v421 = vld [vmem:[%s2 + $0x8] sm:$0xff]
        %v422 = vld [vmem:[%s2 + $0x10] sm:$0xff]
        %v423 = vld [vmem:[%s2 + $0x18] sm:$0xff]
        %425 = vset.pattern.permute.xlu0 0
        %426 = vperm.xlu0 %425, %v420
        %v427 = vpop.permute.xlu0 %426
        %430 = vset.pattern.permute.xlu0 0
        %431 = vperm.xlu0 %430, %v421
        %v432 = vpop.permute.xlu0 %431
        %435 = vset.pattern.permute.xlu0 0
        %436 = vperm.xlu0 %435, %v422
        %v437 = vpop.permute.xlu0 %436
        %440 = vset.pattern.permute.xlu0 0
        %441 = vperm.xlu0 %440, %v423
        %v442 = vpop.permute.xlu0 %441
        %v448 = vunpack.c.l.b16 %v416
        %v449 = vunpack.c.l.b16 %v417
        %v450 = vunpack.c.l.b16 %v418
        %v451 = vunpack.c.l.b16 %v419
        %v452 = vpack.c.b16 %v449, %v448
        %v453 = vpack.c.b16 %v451, %v450
        %v462 = vunpack.c.l.b16 %v408
        %v463 = vunpack.c.h.b16 %v408
        %v464 = vunpack.c.l.b16 %v409
        %v465 = vunpack.c.l.b16 %v410
        %v466 = vunpack.c.h.b16 %v410
        %v467 = vunpack.c.l.b16 %v411
        %v468 = vunpack.c.l.b16 %v412
        %v469 = vunpack.c.h.b16 %v412
        %v470 = vunpack.c.l.b16 %v413
        %v471 = vunpack.c.l.b16 %v414
        %v472 = vunpack.c.h.b16 %v414
        %v473 = vunpack.c.l.b16 %v415
        %v474 = vpack.c.b16 %v465, %v462
        %v475 = vpack.c.b16 %v466, %v463
        %v476 = vpack.c.b16 %v467, %v464
        %v477 = vpack.c.b16 %v471, %v468
        %v478 = vpack.c.b16 %v472, %v469
        %v479 = vpack.c.b16 %v473, %v470
        %vm483 = vcmask 244736
        %v485 = vsel %vm483, %v452, 0
        %v488 = vsel %vm483, %v453, 0
        %vm490 = vcmask 1046528
        %v492 = vsel %vm490, %v477, 0
        %v495 = vsel %vm490, %v478, 0
        %v498 = vsel %vm490, %v479, 0
        %500 = vmatprep.subr.bf16.mxu0 %v475
        %501 = vmatpush1.bf16.msra.mxu0 %v474
        %502 = vmatprep.subr.bf16.mxu0 %v495
        %503 = vmatpush1.bf16.msra.mxu0 %v492
        %504 = vmatprep.subr.bf16.mxu0 0
        %505 = vmatpush1.bf16.msra.mxu0 0
        %506 = vmatprep.subr.bf16.mxu0 0
        %507 = vmatpush1.bf16.msra.mxu0 0
        %508 = vmatprep.subr.bf16.mxu0 0
        %509 = vmatpush1.bf16.msra.mxu0 0
        %510 = vmatprep.subr.bf16.mxu0 0
        %511 = vmatpush1.bf16.msra.mxu0 0
        %512 = vmatprep.subr.bf16.mxu0 0
        %513 = vmatpush1.bf16.msra.mxu0 0
        %514 = vmatprep.subr.bf16.mxu0 0
        %515 = vmatpush1.bf16.msra.mxu0 0
        %516 = vmatprep.subr.bf16.mxu0 0
        %517 = vmatpush1.bf16.msra.mxu0 0
        %518 = vmatprep.subr.bf16.mxu0 0
        %519 = vmatpush1.bf16.msra.mxu0 0
        %520 = vmatprep.subr.bf16.mxu0 0
        %521 = vmatpush1.bf16.msra.mxu0 0
        %522 = vmatprep.subr.bf16.mxu0 0
        %523 = vmatpush1.bf16.msra.mxu0 0
        %524 = vmatprep.subr.bf16.mxu0 0
        %525 = vmatpush1.bf16.msra.mxu0 0
        %526 = vmatprep.subr.bf16.mxu0 0
        %527 = vmatpush1.bf16.msra.mxu0 0
        %528 = vmatprep.subr.bf16.mxu0 0
        %529 = vmatpush1.bf16.msra.mxu0 0
        %530 = vmatprep.subr.bf16.mxu0 0
        %531 = vmatpush1.bf16.msra.mxu0 0
        %532 = vmatprep.mubr.bf16.mxu0 0
        %533 = vmatmul.mubr.bf16.gmra.mrb[0].mxu0 %v485
        %v534 = vpop.f32.mrb[0].mxu0
        %v535 = vadd.f32 %v427, %v534
        %v536 = vpop.f32.mrb[0].mxu0
        %v537 = vadd.f32 %v427, %v536
        %v538 = vpop.f32.mrb[0].mxu0
        %v539 = vadd.f32 %v432, %v538
        %v540 = vpop.f32.mrb[0].mxu0
        %v541 = vadd.f32 %v432, %v540
        %542 = vmatprep.mubr.bf16.mxu0 0
        %543 = vmatmul.mubr.bf16.gmra.mrb[0].mxu0 %v488
        %v544 = vpop.f32.mrb[0].mxu0
        %v545 = vadd.f32 %v437, %v544
        %v546 = vpop.f32.mrb[0].mxu0
        %v547 = vadd.f32 %v437, %v546
        %v548 = vpop.f32.mrb[0].mxu0
        %v549 = vadd.f32 %v442, %v548
        %v550 = vpop.f32.mrb[0].mxu0
        %v551 = vadd.f32 %v442, %v550
        %552 = vdwg.mxu0
        %553 = vmatprep.subr.bf16.mxu0 0
        %554 = vmatpush1.bf16.msra.mxu0 %v476
        %555 = vmatprep.subr.bf16.mxu0 0
        %556 = vmatpush1.bf16.msra.mxu0 %v498
        %557 = vmatprep.subr.bf16.mxu0 0
        %558 = vmatpush1.bf16.msra.mxu0 0
        %559 = vmatprep.subr.bf16.mxu0 0
        %560 = vmatpush1.bf16.msra.mxu0 0
        %561 = vmatprep.subr.bf16.mxu0 0
        %562 = vmatpush1.bf16.msra.mxu0 0
        %563 = vmatprep.subr.bf16.mxu0 0
        %564 = vmatpush1.bf16.msra.mxu0 0
        %565 = vmatprep.subr.bf16.mxu0 0
        %566 = vmatpush1.bf16.msra.mxu0 0
        %567 = vmatprep.subr.bf16.mxu0 0
        %568 = vmatpush1.bf16.msra.mxu0 0
        %569 = vmatprep.subr.bf16.mxu0 0
        %570 = vmatpush1.bf16.msra.mxu0 0
        %571 = vmatprep.subr.bf16.mxu0 0
        %572 = vmatpush1.bf16.msra.mxu0 0
        %573 = vmatprep.subr.bf16.mxu0 0
        %574 = vmatpush1.bf16.msra.mxu0 0
        %575 = vmatprep.subr.bf16.mxu0 0
        %576 = vmatpush1.bf16.msra.mxu0 0
        %577 = vmatprep.subr.bf16.mxu0 0
        %578 = vmatpush1.bf16.msra.mxu0 0
        %579 = vmatprep.subr.bf16.mxu0 0
        %580 = vmatpush1.bf16.msra.mxu0 0
        %581 = vmatprep.subr.bf16.mxu0 0
        %582 = vmatpush1.bf16.msra.mxu0 0
        %583 = vmatprep.subr.bf16.mxu0 0
        %584 = vmatpush1.bf16.msra.mxu0 0
        %585 = vmatprep.mubr.bf16.mxu0 0
        %586 = vmatmul.mubr.bf16.gmra.mrb[0].mxu0 %v485
        %v587 = vpop.f32.mrb[0].mxu0
        %v588 = vadd.f32 %v427, %v587
        %v589 = vpop.f32.mrb[0].mxu0
        %v590 = vpop.f32.mrb[0].mxu0
        %v591 = vadd.f32 %v432, %v590
        %v592 = vpop.f32.mrb[0].mxu0
        %593 = vmatprep.mubr.bf16.mxu0 0
        %594 = vmatmul.mubr.bf16.gmra.mrb[0].mxu0 %v488
        %v595 = vpop.f32.mrb[0].mxu0
        %v596 = vadd.f32 %v437, %v595
        %v597 = vpop.f32.mrb[0].mxu0
        %v598 = vpop.f32.mrb[0].mxu0
        %v599 = vadd.f32 %v442, %v598
        %v600 = vpop.f32.mrb[0].mxu0
        %601 = vdwg.mxu0
        %vm602 = vcmp.gt.f32.partialorder %v535, 0.0
        %vm603 = vcmp.gt.f32.partialorder %v537, 0.0
        %vm604 = vcmp.gt.f32.partialorder %v588, 0.0
        %vm605 = vcmp.gt.f32.partialorder %v539, 0.0
        %vm606 = vcmp.gt.f32.partialorder %v541, 0.0
        %vm607 = vcmp.gt.f32.partialorder %v591, 0.0
        %vm608 = vcmp.gt.f32.partialorder %v545, 0.0
        %vm609 = vcmp.gt.f32.partialorder %v547, 0.0
        %vm610 = vcmp.gt.f32.partialorder %v596, 0.0
        %vm611 = vcmp.gt.f32.partialorder %v549, 0.0
        %vm612 = vcmp.gt.f32.partialorder %v551, 0.0
        %vm613 = vcmp.gt.f32.partialorder %v599, 0.0
        %v614 = vmul.f32 %v535, 0.01
        %v615 = vmul.f32 %v537, 0.01
        %v616 = vmul.f32 %v588, 0.01
        %v617 = vmul.f32 %v539, 0.01
        %v618 = vmul.f32 %v541, 0.01
        %v619 = vmul.f32 %v591, 0.01
        %v620 = vmul.f32 %v545, 0.01
        %v621 = vmul.f32 %v547, 0.01
        %v622 = vmul.f32 %v596, 0.01
        %v623 = vmul.f32 %v549, 0.01
        %v624 = vmul.f32 %v551, 0.01
        %v625 = vmul.f32 %v599, 0.01
        %v626 = vsel %vm602, %v535, %v614
        %v627 = vsel %vm603, %v537, %v615
        %v628 = vsel %vm604, %v588, %v616
        %v629 = vsel %vm605, %v539, %v617
        %v630 = vsel %vm606, %v541, %v618
        %v631 = vsel %vm607, %v591, %v619
        %v632 = vsel %vm608, %v545, %v620
        %v633 = vsel %vm609, %v547, %v621
        %v634 = vsel %vm610, %v596, %v622
        %v635 = vsel %vm611, %v549, %v623
        %v636 = vsel %vm612, %v551, %v624
        %v637 = vsel %vm613, %v599, %v625
        %v638 = vld [vmem:[%s3] sm:$0xf]
        %v639 = vld [vmem:[%s3 + $0x4] sm:$0xf]
        %v640 = vld [vmem:[%s3 + $0x8] sm:$0xf]
        %v641 = vld [vmem:[%s3 + $0xc] sm:$0xf]
        %v642 = vpack.c.bf16 %v629, %v626
        %v643 = vpack.c.bf16 %v630, %v627
        %v644 = vpack.c.bf16 %v631, %v628
        %v645 = vpack.c.bf16 %v635, %v632
        %v646 = vpack.c.bf16 %v636, %v633
        %v647 = vpack.c.bf16 %v637, %v634
        %v648 = vld [vmem:[%s4] sm:$0xff]
        %v649 = vld [vmem:[%s4 + $0x8] sm:$0xff]
        %v650 = vld [vmem:[%s4 + $0x10] sm:$0xff]
        %v651 = vld [vmem:[%s4 + $0x18] sm:$0xff]
        %653 = vset.pattern.permute.xlu0 0
        %654 = vperm.xlu0 %653, %v648
        %v655 = vpop.permute.xlu0 %654
        %658 = vset.pattern.permute.xlu0 0
        %659 = vperm.xlu0 %658, %v649
        %v660 = vpop.permute.xlu0 %659
        %663 = vset.pattern.permute.xlu0 0
        %664 = vperm.xlu0 %663, %v650
        %v665 = vpop.permute.xlu0 %664
        %668 = vset.pattern.permute.xlu0 0
        %669 = vperm.xlu0 %668, %v651
        %v670 = vpop.permute.xlu0 %669
        %v676 = vunpack.c.l.b16 %v638
        %v677 = vunpack.c.l.b16 %v639
        %v678 = vunpack.c.l.b16 %v640
        %v679 = vunpack.c.l.b16 %v641
        %v680 = vpack.c.b16 %v677, %v676
        %v681 = vpack.c.b16 %v679, %v678
        %vm682 = vcmask 261120
        %v684 = vsel %vm682, %v680, 0
        %v687 = vsel %vm682, %v681, 0
        %689 = vmatprep.subr.bf16.mxu0 %v643
        %690 = vmatpush1.bf16.msra.mxu0 %v642
        %691 = vmatprep.subr.bf16.mxu0 %v646
        %692 = vmatpush1.bf16.msra.mxu0 %v645
        %693 = vmatprep.subr.bf16.mxu0 0
        %694 = vmatpush1.bf16.msra.mxu0 0
        %695 = vmatprep.subr.bf16.mxu0 0
        %696 = vmatpush1.bf16.msra.mxu0 0
        %697 = vmatprep.subr.bf16.mxu0 0
        %698 = vmatpush1.bf16.msra.mxu0 0
        %699 = vmatprep.subr.bf16.mxu0 0
        %700 = vmatpush1.bf16.msra.mxu0 0
        %701 = vmatprep.subr.bf16.mxu0 0
        %702 = vmatpush1.bf16.msra.mxu0 0
        %703 = vmatprep.subr.bf16.mxu0 0
        %704 = vmatpush1.bf16.msra.mxu0 0
        %705 = vmatprep.subr.bf16.mxu0 0
        %706 = vmatpush1.bf16.msra.mxu0 0
        %707 = vmatprep.subr.bf16.mxu0 0
        %708 = vmatpush1.bf16.msra.mxu0 0
        %709 = vmatprep.subr.bf16.mxu0 0
        %710 = vmatpush1.bf16.msra.mxu0 0
        %711 = vmatprep.subr.bf16.mxu0 0
        %712 = vmatpush1.bf16.msra.mxu0 0
        %713 = vmatprep.subr.bf16.mxu0 0
        %714 = vmatpush1.bf16.msra.mxu0 0
        %715 = vmatprep.subr.bf16.mxu0 0
        %716 = vmatpush1.bf16.msra.mxu0 0
        %717 = vmatprep.subr.bf16.mxu0 0
        %718 = vmatpush1.bf16.msra.mxu0 0
        %719 = vmatprep.subr.bf16.mxu0 0
        %720 = vmatpush1.bf16.msra.mxu0 0
        %721 = vmatprep.mubr.bf16.mxu0 0
        %722 = vmatmul.mubr.bf16.gmra.mrb[0].mxu0 %v684
        %v723 = vpop.f32.mrb[0].mxu0
        %v724 = vadd.f32 %v655, %v723
        %v725 = vpop.f32.mrb[0].mxu0
        %v726 = vadd.f32 %v655, %v725
        %v727 = vpop.f32.mrb[0].mxu0
        %v728 = vadd.f32 %v660, %v727
        %v729 = vpop.f32.mrb[0].mxu0
        %v730 = vadd.f32 %v660, %v729
        %731 = vmatprep.mubr.bf16.mxu0 0
        %732 = vmatmul.mubr.bf16.gmra.mrb[0].mxu0 %v687
        %v733 = vpop.f32.mrb[0].mxu0
        %v734 = vadd.f32 %v665, %v733
        %v735 = vpop.f32.mrb[0].mxu0
        %v736 = vadd.f32 %v665, %v735
        %v737 = vpop.f32.mrb[0].mxu0
        %v738 = vadd.f32 %v670, %v737
        %v739 = vpop.f32.mrb[0].mxu0
        %v740 = vadd.f32 %v670, %v739
        %741 = vdwg.mxu0
        %742 = vmatprep.subr.bf16.mxu0 0
        %743 = vmatpush1.bf16.msra.mxu0 %v644
        %744 = vmatprep.subr.bf16.mxu0 0
        %745 = vmatpush1.bf16.msra.mxu0 %v647
        %746 = vmatprep.subr.bf16.mxu0 0
        %747 = vmatpush1.bf16.msra.mxu0 0
        %748 = vmatprep.subr.bf16.mxu0 0
        %749 = vmatpush1.bf16.msra.mxu0 0
        %750 = vmatprep.subr.bf16.mxu0 0
        %751 = vmatpush1.bf16.msra.mxu0 0
        %752 = vmatprep.subr.bf16.mxu0 0
        %753 = vmatpush1.bf16.msra.mxu0 0
        %754 = vmatprep.subr.bf16.mxu0 0
        %755 = vmatpush1.bf16.msra.mxu0 0
        %756 = vmatprep.subr.bf16.mxu0 0
        %757 = vmatpush1.bf16.msra.mxu0 0
        %758 = vmatprep.subr.bf16.mxu0 0
        %759 = vmatpush1.bf16.msra.mxu0 0
        %760 = vmatprep.subr.bf16.mxu0 0
        %761 = vmatpush1.bf16.msra.mxu0 0
        %762 = vmatprep.subr.bf16.mxu0 0
        %763 = vmatpush1.bf16.msra.mxu0 0
        %764 = vmatprep.subr.bf16.mxu0 0
        %765 = vmatpush1.bf16.msra.mxu0 0
        %766 = vmatprep.subr.bf16.mxu0 0
        %767 = vmatpush1.bf16.msra.mxu0 0
        %768 = vmatprep.subr.bf16.mxu0 0
        %769 = vmatpush1.bf16.msra.mxu0 0
        %770 = vmatprep.subr.bf16.mxu0 0
        %771 = vmatpush1.bf16.msra.mxu0 0
        %772 = vmatprep.subr.bf16.mxu0 0
        %773 = vmatpush1.bf16.msra.mxu0 0
        %774 = vmatprep.mubr.bf16.mxu0 0
        %775 = vmatmul.mubr.bf16.gmra.mrb[0].mxu0 %v684
        %v776 = vpop.f32.mrb[0].mxu0
        %v777 = vadd.f32 %v655, %v776
        %v778 = vpop.f32.mrb[0].mxu0
        %v779 = vpop.f32.mrb[0].mxu0
        %v780 = vadd.f32 %v660, %v779
        %v781 = vpop.f32.mrb[0].mxu0
        %782 = vmatprep.mubr.bf16.mxu0 0
        %783 = vmatmul.mubr.bf16.gmra.mrb[0].mxu0 %v687
        %v784 = vpop.f32.mrb[0].mxu0
        %v785 = vadd.f32 %v665, %v784
        %v786 = vpop.f32.mrb[0].mxu0
        %v787 = vpop.f32.mrb[0].mxu0
        %v788 = vadd.f32 %v670, %v787
        %v789 = vpop.f32.mrb[0].mxu0
        %790 = vdwg.mxu0
        %vm791 = vcmp.gt.f32.partialorder %v724, 0.0
        %vm792 = vcmp.gt.f32.partialorder %v726, 0.0
        %vm793 = vcmp.gt.f32.partialorder %v777, 0.0
        %vm794 = vcmp.gt.f32.partialorder %v728, 0.0
        %vm795 = vcmp.gt.f32.partialorder %v730, 0.0
        %vm796 = vcmp.gt.f32.partialorder %v780, 0.0
        %vm797 = vcmp.gt.f32.partialorder %v734, 0.0
        %vm798 = vcmp.gt.f32.partialorder %v736, 0.0
        %vm799 = vcmp.gt.f32.partialorder %v785, 0.0
        %vm800 = vcmp.gt.f32.partialorder %v738, 0.0
        %vm801 = vcmp.gt.f32.partialorder %v740, 0.0
        %vm802 = vcmp.gt.f32.partialorder %v788, 0.0
        %v803 = vmul.f32 %v724, 0.01
        %v804 = vmul.f32 %v726, 0.01
        %v805 = vmul.f32 %v777, 0.01
        %v806 = vmul.f32 %v728, 0.01
        %v807 = vmul.f32 %v730, 0.01
        %v808 = vmul.f32 %v780, 0.01
        %v809 = vmul.f32 %v734, 0.01
        %v810 = vmul.f32 %v736, 0.01
        %v811 = vmul.f32 %v785, 0.01
        %v812 = vmul.f32 %v738, 0.01
        %v813 = vmul.f32 %v740, 0.01
        %v814 = vmul.f32 %v788, 0.01
        %v815 = vsel %vm791, %v724, %v803
        %v816 = vsel %vm792, %v726, %v804
        %v817 = vsel %vm793, %v777, %v805
        %v818 = vsel %vm794, %v728, %v806
        %v819 = vsel %vm795, %v730, %v807
        %v820 = vsel %vm796, %v780, %v808
        %v821 = vsel %vm797, %v734, %v809
        %v822 = vsel %vm798, %v736, %v810
        %v823 = vsel %vm799, %v785, %v811
        %v824 = vsel %vm800, %v738, %v812
        %v825 = vsel %vm801, %v740, %v813
        %v826 = vsel %vm802, %v788, %v814
        %v827 = vld [vmem:[#allocation7] sm:$0xf]
        %v828 = vld [vmem:[#allocation7 + $0x4] sm:$0xf]
        %v829 = vld [vmem:[#allocation7 + $0x8] sm:$0xf]
        %v830 = vld [vmem:[#allocation7 + $0xc] sm:$0xf]
        %v831 = vpack.c.bf16 %v818, %v815
        %v832 = vpack.c.bf16 %v819, %v816
        %v833 = vpack.c.bf16 %v820, %v817
        %v834 = vpack.c.bf16 %v824, %v821
        %v835 = vpack.c.bf16 %v825, %v822
        %v836 = vpack.c.bf16 %v826, %v823
        %v837 = vld [vmem:[%s6] sm:$0xff]
        %v838 = vld [vmem:[%s6 + $0x8] sm:$0xff]
        %v839 = vld [vmem:[%s6 + $0x10] sm:$0xff]
        %v840 = vld [vmem:[%s6 + $0x18] sm:$0xff]
        %842 = vset.pattern.permute.xlu0 0
        %843 = vperm.xlu0 %842, %v837
        %v844 = vpop.permute.xlu0 %843
        %847 = vset.pattern.permute.xlu0 0
        %848 = vperm.xlu0 %847, %v838
        %v849 = vpop.permute.xlu0 %848
        %852 = vset.pattern.permute.xlu0 0
        %853 = vperm.xlu0 %852, %v839
        %v854 = vpop.permute.xlu0 %853
        %857 = vset.pattern.permute.xlu0 0
        %858 = vperm.xlu0 %857, %v840
        %v859 = vpop.permute.xlu0 %858
        %v865 = vunpack.c.l.b16 %v827
        %v866 = vunpack.c.l.b16 %v828
        %v867 = vunpack.c.l.b16 %v829
        %v868 = vunpack.c.l.b16 %v830
        %v869 = vpack.c.b16 %v866, %v865
        %v870 = vpack.c.b16 %v868, %v867
        %v872 = vsel %vm682, %v869, 0
        %v875 = vsel %vm682, %v870, 0
        %877 = vmatprep.subr.bf16.mxu0 %v832
        %878 = vmatpush1.bf16.msra.mxu0 %v831
        %879 = vmatprep.subr.bf16.mxu0 %v835
        %880 = vmatpush1.bf16.msra.mxu0 %v834
        %881 = vmatprep.subr.bf16.mxu0 0
        %882 = vmatpush1.bf16.msra.mxu0 0
        %883 = vmatprep.subr.bf16.mxu0 0
        %884 = vmatpush1.bf16.msra.mxu0 0
        %885 = vmatprep.subr.bf16.mxu0 0
        %886 = vmatpush1.bf16.msra.mxu0 0
        %887 = vmatprep.subr.bf16.mxu0 0
        %888 = vmatpush1.bf16.msra.mxu0 0
        %889 = vmatprep.subr.bf16.mxu0 0
        %890 = vmatpush1.bf16.msra.mxu0 0
        %891 = vmatprep.subr.bf16.mxu0 0
        %892 = vmatpush1.bf16.msra.mxu0 0
        %893 = vmatprep.subr.bf16.mxu0 0
        %894 = vmatpush1.bf16.msra.mxu0 0
        %895 = vmatprep.subr.bf16.mxu0 0
        %896 = vmatpush1.bf16.msra.mxu0 0
        %897 = vmatprep.subr.bf16.mxu0 0
        %898 = vmatpush1.bf16.msra.mxu0 0
        %899 = vmatprep.subr.bf16.mxu0 0
        %900 = vmatpush1.bf16.msra.mxu0 0
        %901 = vmatprep.subr.bf16.mxu0 0
        %902 = vmatpush1.bf16.msra.mxu0 0
        %903 = vmatprep.subr.bf16.mxu0 0
        %904 = vmatpush1.bf16.msra.mxu0 0
        %905 = vmatprep.subr.bf16.mxu0 0
        %906 = vmatpush1.bf16.msra.mxu0 0
        %907 = vmatprep.subr.bf16.mxu0 0
        %908 = vmatpush1.bf16.msra.mxu0 0
        %909 = vmatprep.mubr.bf16.mxu0 0
        %910 = vmatmul.mubr.bf16.gmra.mrb[0].mxu0 %v872
        %v911 = vpop.f32.mrb[0].mxu0
        %v912 = vadd.f32 %v844, %v911
        %v913 = vpop.f32.mrb[0].mxu0
        %v914 = vadd.f32 %v844, %v913
        %v915 = vpop.f32.mrb[0].mxu0
        %v916 = vadd.f32 %v849, %v915
        %v917 = vpop.f32.mrb[0].mxu0
        %v918 = vadd.f32 %v849, %v917
        %919 = vmatprep.mubr.bf16.mxu0 0
        %920 = vmatmul.mubr.bf16.gmra.mrb[0].mxu0 %v875
        %v921 = vpop.f32.mrb[0].mxu0
        %v922 = vadd.f32 %v854, %v921
        %v923 = vpop.f32.mrb[0].mxu0
        %v924 = vadd.f32 %v854, %v923
        %v925 = vpop.f32.mrb[0].mxu0
        %v926 = vadd.f32 %v859, %v925
        %v927 = vpop.f32.mrb[0].mxu0
        %v928 = vadd.f32 %v859, %v927
        %929 = vdwg.mxu0
        %930 = vmatprep.subr.bf16.mxu0 0
        %931 = vmatpush1.bf16.msra.mxu0 %v833
        %932 = vmatprep.subr.bf16.mxu0 0
        %933 = vmatpush1.bf16.msra.mxu0 %v836
        %934 = vmatprep.subr.bf16.mxu0 0
        %935 = vmatpush1.bf16.msra.mxu0 0
        %936 = vmatprep.subr.bf16.mxu0 0
        %937 = vmatpush1.bf16.msra.mxu0 0
        %938 = vmatprep.subr.bf16.mxu0 0
        %939 = vmatpush1.bf16.msra.mxu0 0
        %940 = vmatprep.subr.bf16.mxu0 0
        %941 = vmatpush1.bf16.msra.mxu0 0
        %942 = vmatprep.subr.bf16.mxu0 0
        %943 = vmatpush1.bf16.msra.mxu0 0
        %944 = vmatprep.subr.bf16.mxu0 0
        %945 = vmatpush1.bf16.msra.mxu0 0
        %946 = vmatprep.subr.bf16.mxu0 0
        %947 = vmatpush1.bf16.msra.mxu0 0
        %948 = vmatprep.subr.bf16.mxu0 0
        %949 = vmatpush1.bf16.msra.mxu0 0
        %950 = vmatprep.subr.bf16.mxu0 0
        %951 = vmatpush1.bf16.msra.mxu0 0
        %952 = vmatprep.subr.bf16.mxu0 0
        %953 = vmatpush1.bf16.msra.mxu0 0
        %954 = vmatprep.subr.bf16.mxu0 0
        %955 = vmatpush1.bf16.msra.mxu0 0
        %956 = vmatprep.subr.bf16.mxu0 0
        %957 = vmatpush1.bf16.msra.mxu0 0
        %958 = vmatprep.subr.bf16.mxu0 0
        %959 = vmatpush1.bf16.msra.mxu0 0
        %960 = vmatprep.subr.bf16.mxu0 0
        %961 = vmatpush1.bf16.msra.mxu0 0
        %962 = vmatprep.mubr.bf16.mxu0 0
        %963 = vmatmul.mubr.bf16.gmra.mrb[0].mxu0 %v872
        %v964 = vpop.f32.mrb[0].mxu0
        %v965 = vadd.f32 %v844, %v964
        %v966 = vpop.f32.mrb[0].mxu0
        %v967 = vpop.f32.mrb[0].mxu0
        %v968 = vadd.f32 %v849, %v967
        %v969 = vpop.f32.mrb[0].mxu0
        %970 = vmatprep.mubr.bf16.mxu0 0
        %971 = vmatmul.mubr.bf16.gmra.mrb[0].mxu0 %v875
        %v972 = vpop.f32.mrb[0].mxu0
        %v973 = vadd.f32 %v854, %v972
        %v974 = vpop.f32.mrb[0].mxu0
        %v975 = vpop.f32.mrb[0].mxu0
        %v976 = vadd.f32 %v859, %v975
        %v977 = vpop.f32.mrb[0].mxu0
        %978 = vdwg.mxu0
        %vm979 = vcmp.gt.f32.partialorder %v912, 0.0
        %vm980 = vcmp.gt.f32.partialorder %v914, 0.0
        %vm981 = vcmp.gt.f32.partialorder %v965, 0.0
        %vm982 = vcmp.gt.f32.partialorder %v916, 0.0
        %vm983 = vcmp.gt.f32.partialorder %v918, 0.0
        %vm984 = vcmp.gt.f32.partialorder %v968, 0.0
        %vm985 = vcmp.gt.f32.partialorder %v922, 0.0
        %vm986 = vcmp.gt.f32.partialorder %v924, 0.0
        %vm987 = vcmp.gt.f32.partialorder %v973, 0.0
        %vm988 = vcmp.gt.f32.partialorder %v926, 0.0
        %vm989 = vcmp.gt.f32.partialorder %v928, 0.0
        %vm990 = vcmp.gt.f32.partialorder %v976, 0.0
        %v991 = vmul.f32 %v912, 0.01
        %v992 = vmul.f32 %v914, 0.01
        %v993 = vmul.f32 %v965, 0.01
        %v994 = vmul.f32 %v916, 0.01
        %v995 = vmul.f32 %v918, 0.01
        %v996 = vmul.f32 %v968, 0.01
        %v997 = vmul.f32 %v922, 0.01
        %v998 = vmul.f32 %v924, 0.01
        %v999 = vmul.f32 %v973, 0.01
        %v1000 = vmul.f32 %v926, 0.01
        %v1001 = vmul.f32 %v928, 0.01
        %v1002 = vmul.f32 %v976, 0.01
        %v1003 = vsel %vm979, %v912, %v991
        %v1004 = vsel %vm980, %v914, %v992
        %v1005 = vsel %vm981, %v965, %v993
        %v1006 = vsel %vm982, %v916, %v994
        %v1007 = vsel %vm983, %v918, %v995
        %v1008 = vsel %vm984, %v968, %v996
        %v1009 = vsel %vm985, %v922, %v997
        %v1010 = vsel %vm986, %v924, %v998
        %v1011 = vsel %vm987, %v973, %v999
        %v1012 = vsel %vm988, %v926, %v1000
        %v1013 = vsel %vm989, %v928, %v1001
        %v1014 = vsel %vm990, %v976, %v1002
        %v1015 = vld [vmem:[%s7] sm:$0x1]
        %v1016 = vpack.c.bf16 %v1006, %v1003
        %v1017 = vpack.c.bf16 %v1007, %v1004
        %v1018 = vpack.c.bf16 %v1008, %v1005
        %v1019 = vpack.c.bf16 %v1012, %v1009
        %v1020 = vpack.c.bf16 %v1013, %v1010
        %v1021 = vpack.c.bf16 %v1014, %v1011
        %s1022 = sld [smem:[#allocation2]]
        %v1023 = vstv %s1022
        %v1025 = vsel %vm682, %v1015, 0
        %1027 = vmatprep.subr.bf16.mxu0 %v1017
        %1028 = vmatpush1.bf16.msra.mxu0 %v1016
        %1029 = vmatprep.subr.bf16.mxu0 %v1020
        %1030 = vmatpush1.bf16.msra.mxu0 %v1019
        %1031 = vmatprep.subr.bf16.mxu0 0
        %1032 = vmatpush1.bf16.msra.mxu0 0
        %1033 = vmatprep.subr.bf16.mxu0 0
        %1034 = vmatpush1.bf16.msra.mxu0 0
        %1035 = vmatprep.subr.bf16.mxu0 0
        %1036 = vmatpush1.bf16.msra.mxu0 0
        %1037 = vmatprep.subr.bf16.mxu0 0
        %1038 = vmatpush1.bf16.msra.mxu0 0
        %1039 = vmatprep.subr.bf16.mxu0 0
        %1040 = vmatpush1.bf16.msra.mxu0 0
        %1041 = vmatprep.subr.bf16.mxu0 0
        %1042 = vmatpush1.bf16.msra.mxu0 0
        %1043 = vmatprep.subr.bf16.mxu0 0
        %1044 = vmatpush1.bf16.msra.mxu0 0
        %1045 = vmatprep.subr.bf16.mxu0 0
        %1046 = vmatpush1.bf16.msra.mxu0 0
        %1047 = vmatprep.subr.bf16.mxu0 0
        %1048 = vmatpush1.bf16.msra.mxu0 0
        %1049 = vmatprep.subr.bf16.mxu0 0
        %1050 = vmatpush1.bf16.msra.mxu0 0
        %1051 = vmatprep.subr.bf16.mxu0 0
        %1052 = vmatpush1.bf16.msra.mxu0 0
        %1053 = vmatprep.subr.bf16.mxu0 0
        %1054 = vmatpush1.bf16.msra.mxu0 0
        %1055 = vmatprep.subr.bf16.mxu0 0
        %1056 = vmatpush1.bf16.msra.mxu0 0
        %1057 = vmatprep.subr.bf16.mxu0 0
        %1058 = vmatpush1.bf16.msra.mxu0 0
        %1059 = vmatprep.mubr.bf16.mxu0 0
        %1060 = vmatmul.mubr.bf16.gmra.mrb[0].mxu0 %v1025
        %v1061 = vpop.f32.mrb[0].mxu0
        %v1062 = vadd.f32 %v1023, %v1061
        %v1063 = vpop.f32.mrb[0].mxu0
        %v1064 = vadd.f32 %v1023, %v1063
        %v1065 = vpop.f32.mrb[0].mxu0
        %v1066 = vpop.f32.mrb[0].mxu0
        %1067 = vdwg.mxu0
        %1068 = vmatprep.subr.bf16.mxu0 0
        %1069 = vmatpush1.bf16.msra.mxu0 %v1018
        %1070 = vmatprep.subr.bf16.mxu0 0
        %1071 = vmatpush1.bf16.msra.mxu0 %v1021
        %1072 = vmatprep.subr.bf16.mxu0 0
        %1073 = vmatpush1.bf16.msra.mxu0 0
        %1074 = vmatprep.subr.bf16.mxu0 0
        %1075 = vmatpush1.bf16.msra.mxu0 0
        %1076 = vmatprep.subr.bf16.mxu0 0
        %1077 = vmatpush1.bf16.msra.mxu0 0
        %1078 = vmatprep.subr.bf16.mxu0 0
        %1079 = vmatpush1.bf16.msra.mxu0 0
        %1080 = vmatprep.subr.bf16.mxu0 0
        %1081 = vmatpush1.bf16.msra.mxu0 0
        %1082 = vmatprep.subr.bf16.mxu0 0
        %1083 = vmatpush1.bf16.msra.mxu0 0
        %1084 = vmatprep.subr.bf16.mxu0 0
        %1085 = vmatpush1.bf16.msra.mxu0 0
        %1086 = vmatprep.subr.bf16.mxu0 0
        %1087 = vmatpush1.bf16.msra.mxu0 0
        %1088 = vmatprep.subr.bf16.mxu0 0
        %1089 = vmatpush1.bf16.msra.mxu0 0
        %1090 = vmatprep.subr.bf16.mxu0 0
        %1091 = vmatpush1.bf16.msra.mxu0 0
        %1092 = vmatprep.subr.bf16.mxu0 0
        %1093 = vmatpush1.bf16.msra.mxu0 0
        %1094 = vmatprep.subr.bf16.mxu0 0
        %1095 = vmatpush1.bf16.msra.mxu0 0
        %1096 = vmatprep.subr.bf16.mxu0 0
        %1097 = vmatpush1.bf16.msra.mxu0 0
        %1098 = vmatprep.subr.bf16.mxu0 0
        %1099 = vmatpush1.bf16.msra.mxu0 0
        %1100 = vmatprep.mubr.bf16.mxu0 0
        %1101 = vmatmul.mubr.bf16.gmra.mrb[0].mxu0 %v1025
        %v1102 = vpop.f32.mrb[0].mxu0
        %v1103 = vadd.f32 %v1023, %v1102
        %v1104 = vpop.f32.mrb[0].mxu0
        %v1105 = vpop.f32.mrb[0].mxu0
        %v1106 = vpop.f32.mrb[0].mxu0
        %1107 = vdwg.mxu0
        %v1111 = vcombine.low %v1062, %v1064
        %v1113 = vunpack.c.l.s4 1966171168
        %v1114 = vunpack.c.0.s8 %v1113
        %v1115 = vlaneseq
        %v1116 = vshrl.u32 %v1115, 7
        %v1117 = vsub.s32 %v1114, %v1116
        %v1118 = vrot.slane %v1111, %v1117
        %v1120 = vunpack.c.l.s4 1966171168
        %v1121 = vunpack.c.0.s8 %v1120
        %v1122 = vlaneseq
        %v1123 = vshrl.u32 %v1122, 7
        %v1124 = vsub.s32 %v1121, %v1123
        %v1125 = vrot.slane %v1103, %v1124
        %v1126 = vcombine.low %v1118, %v1125
        %v1128 = vunpack.c.l.s4 1966171168
        %v1129 = vunpack.c.0.s8 %v1128
        %v1130 = vlaneseq
        %v1131 = vshrl.u32 %v1130, 7
        %v1132 = vsub.s32 %v1129, %v1131
        %v1133 = vrot.slane %v1126, %v1132
        %v1135 = vlaneseq
        %vm1136 = vcmp.ge.s32.totalorder %v1135, 0
        %vm1137 = vcmp.lt.s32.totalorder %v1135, 384
        %vm1138 = vmand %vm1136, %vm1137
        %1139 = vst.msk [vmem:[%s404] sm:$0x7] %vm1138, %v1133
        %s1140 = sand.u32 %s228, 1
        %s1141 = scalar_lea.sflag [#allocation6], %s1140
        %s1142 = sand.u32 %s228, 1
        %s1143 = smul.addr %s1142, 3
        %s1144 = scalar_lea.vmem [#allocation9], %s1143
        // Predicated region
        $region91: #{tpu_custom_call.1} parent=77 // pred_check
          %p1145 = pneg %p238
        $region92: #{tpu_custom_call.1} parent=77 // pred_check_branch
          %1147 = sbr.rel (%p1145) target = $region94
        $region93: #{tpu_custom_call.1} parent=77 // pred_region
          %s1148 = smul.u32 3, %s26
          %s1150 = ssub.s32 48, 48
          %1151 = vsyncadd %s1141, %s1150
          %s1152 = smul.addr %s1148, 16
          %s1153 = scalar_lea.hbm %s9, %s1152
          %s1155 = sshll.u32 %s1144, 4
          %s1156 = int_to_ptr.vmem [resolvable:$true] %s1155
          %1158 = dma.vmem_to_hbm [thread:$0]  %s1156, 48, %s1153, %s1141
        $region94: #{tpu_custom_call.1} parent=77 // pred_fallthru
          _
      $region78: #{tpu_custom_call.1} parent=5 // pred_fallthru
        _
      %p1159 = scmp.le.s32.totalorder 2, %s21
      // Predicated region
      $region95: #{tpu_custom_call.1} parent=5 // pred_check
        %p1160 = pneg %p1159
      $region96: #{tpu_custom_call.1} parent=5 // pred_check_branch
        %1162 = sbr.rel (%p1160) target = $region98
      $region97: #{tpu_custom_call.1} parent=5 // pred_region
        %s1163 = ssub.s32 %s21, 2
        // Predicated region
        $region99: #{tpu_custom_call.1} parent=97 // pred_check
          %p1164 = pneg %p244
        $region100: #{tpu_custom_call.1} parent=97 // pred_check_branch
          %1166 = sbr.rel (%p1164) target = $region102
        $region101: #{tpu_custom_call.1} parent=97 // pred_region
          %s1167 = sand.u32 %s229, 1
          %s1168 = scalar_lea.sflag [#allocation6], %s1167
          %s1169 = sand.u32 %s229, 1
          %s1170 = smul.addr %s1169, 3
          %s1171 = scalar_lea.vmem [#allocation9], %s1170
          %1172 = dma.done %s1168, 48
        $region102: #{tpu_custom_call.1} parent=97 // pred_fallthru
          _
      $region98: #{tpu_custom_call.1} parent=5 // pred_fallthru
        _
    $region6: #{tpu_custom_call.1} parent=1 // loop_footer
      %s25 = sadd.s32 1, %s21
    $region7: #{tpu_custom_call.1} parent=1 // loop_footer_branch
      %20 = sbr.rel target = $region3
    $region8: #{tpu_custom_call.1} parent=1 // loop_exit
      _
    %1173 = vsyncpa [#allocation5], 1
    %s1174 = scalar_lea.sflag [#allocation5], 1
    %1175 = vsyncpa %s1174, 1
    %1176 = vsyncpa [#allocation8], 1
    %1177 = vsyncpa [#allocation6], 1
    %s1178 = scalar_lea.sflag [#allocation6], 1
    %1179 = vsyncpa %s1178, 1

</llo_original>
